<compile_context>
chip_gen: v5e
topology: v5e:2x2
jax: 0.10.0
libtpu: 0.0.40
codegen_flags: <defaults>
</compile_context>

<pallas_src>
import functools

import jax
import jax.numpy as jnp
from jax import lax
from jax.experimental import pallas as pl
from jax.experimental.pallas import tpu as pltpu


def _round_up(x, m):
    return ((x + m - 1) // m) * m


def _lshift_lanes(v, t):
    """Circular left shift along lanes: result[:, i] = v[:, (i + t) % L].

    Only the first L - t lanes feed valid output positions; the wrapped tail lands in
    the padded-pitch garbage region (h >= Ho or w >= Wo) which is masked / sliced away.
    """
    if t == 0:
        return v
    return jnp.concatenate([v[:, t:], v[:, :t]], axis=1)


def _convt_tap_kernel(x_ref, w_ref, mask_ref, out_ref, stats_ref, *, K, Wp):
    """One (n, do, kd) grid step of the transposed conv.

    x_ref:     (Cin_p, Hp*Wp)        d-slice (do + kd) of the dilated / padded input
    w_ref:     (K, K, Cout_p, Cin_p) flipped weight taps for this kd
    mask_ref:  (1, Hp*Wp)            1.0 on valid (h < Ho, w < Wo) lanes
    out_ref:   (Cout_p, Hp*Wp)       f32, revisited across the kd axis (accumulator)
    stats_ref: (Cout_p, 2)           per-(n, do) [sum, sum-of-squares] over valid lanes
    """
    kd = pl.program_id(2)

    @pl.when(kd == 0)
    def _init():
        out_ref[...] = jnp.zeros_like(out_ref)

    x = x_ref[...]
    acc = jnp.zeros(out_ref.shape, jnp.float32)
    for kh in range(K):
        for kw in range(K):
            prod = jnp.dot(w_ref[kh, kw], x, preferred_element_type=jnp.float32)
            acc = acc + _lshift_lanes(prod, kh * Wp + kw)
    out_ref[...] += acc

    @pl.when(kd == K - 1)
    def _finalize():
        v = out_ref[...] * mask_ref[...]
        s1 = jnp.sum(v, axis=1, keepdims=True)
        s2 = jnp.sum(v * v, axis=1, keepdims=True)
        stats_ref[...] = jnp.concatenate([s1, s2], axis=1)


def _bn_relu_kernel(x_ref, scale_ref, shift_ref, o_ref, *, use_relu):
    y = x_ref[...] * scale_ref[...] + shift_ref[...]
    if use_relu:
        y = jnp.maximum(y, 0.0)
    o_ref[...] = y


def conv_transpose3d_bn(x, weight, gamma, beta, *, stride, padding,
                        output_padding, eps=1e-5, use_relu=True,
                        compute_dtype=jnp.float32):
    """Forward of ConvTranspose3dBn with BatchNorm3d in training mode (batch statistics,
    biased variance), matching a freshly constructed PyTorch module's forward()."""
    N, Cin, D, H, W = x.shape
    _, Cout, K, _, _ = weight.shape
    s, p, op = stride, padding, output_padding

    Do = (D - 1) * s - 2 * p + K + op
    Ho = (H - 1) * s - 2 * p + K + op
    Wo = (W - 1) * s - 2 * p + K + op
    Dp, Hp, Wp = Do + K - 1, Ho + K - 1, Wo + K - 1
    L = Hp * Wp
    lo, hi = K - 1 - p, K - 1 - p + op          # lax.pad accepts negative lows (crops)

    Cin_p = _round_up(Cin, 8)
    Cout_p = _round_up(Cout, 8)

    # ---- XLA glue: zero-dilate + pad + channel-pad the input in ONE lax.pad ----------
    # layout (N, Dp, Cin_p, Hp*Wp): channels on sublanes, flattened spatial on lanes.
    x_t = jnp.transpose(x, (0, 2, 1, 3, 4)).astype(compute_dtype)    # (N, D, Cin, H, W)
    zero = jnp.zeros((), compute_dtype)
    x_pad = lax.pad(x_t, zero, ((0, 0, 0),
                                (lo, hi, s - 1),
                                (0, Cin_p - Cin, 0),
                                (lo, hi, s - 1),
                                (lo, hi, s - 1)))                    # (N, Dp, Cin_p, Hp, Wp)
    x_r = x_pad.reshape(N, Dp, Cin_p, L)

    # flipped weight, one (Cout_p, Cin_p) matrix per tap: w_r[kd, kh, kw, co, ci]
    w_r = jnp.transpose(jnp.flip(weight, axis=(2, 3, 4)), (2, 3, 4, 1, 0))
    w_r = jnp.pad(w_r, ((0, 0), (0, 0), (0, 0),
                        (0, Cout_p - Cout), (0, Cin_p - Cin))).astype(compute_dtype)

    # valid-lane mask inside the padded-pitch (Hp, Wp) plane
    mask = ((jnp.arange(Hp) < Ho)[:, None] & (jnp.arange(Wp) < Wo)[None, :])
    mask = mask.reshape(1, L).astype(jnp.float32)

    # ---- fused transposed-conv + BN partial statistics ---------------------------------
    conv, stats = pl.pallas_call(
        functools.partial(_convt_tap_kernel, K=K, Wp=Wp),
        grid=(N, Do, K),
        in_specs=[
            pl.BlockSpec((None, None, Cin_p, L), lambda n, do, kd: (n, do + kd, 0, 0)),
            pl.BlockSpec((None, K, K, Cout_p, Cin_p), lambda n, do, kd: (kd, 0, 0, 0, 0)),
            pl.BlockSpec((1, L), lambda n, do, kd: (0, 0)),
        ],
        out_specs=[
            pl.BlockSpec((None, None, Cout_p, L), lambda n, do, kd: (n, do, 0, 0)),
            pl.BlockSpec((None, None, Cout_p, 2), lambda n, do, kd: (n, do, 0, 0)),
        ],
        out_shape=[
            jax.ShapeDtypeStruct((N, Do, Cout_p, L), jnp.float32),
            jax.ShapeDtypeStruct((N, Do, Cout_p, 2), jnp.float32),
        ],
        compiler_params=pltpu.CompilerParams(
            dimension_semantics=("parallel", "parallel", "arbitrary"),
            vmem_limit_bytes=48 * 1024 * 1024),
    )(x_r, w_r, mask)

    # ---- BatchNorm3d training-mode batch statistics from the fused partial sums --------
    cnt = float(N * Do * Ho * Wo)
    tot = jnp.sum(stats, axis=(0, 1))                           # (Cout_p, 2)
    mean = tot[:, 0] / cnt
    var = jnp.maximum(tot[:, 1] / cnt - mean * mean, 0.0)       # biased variance
    gamma_p = jnp.pad(gamma.astype(jnp.float32), (0, Cout_p - Cout))
    beta_p = jnp.pad(beta.astype(jnp.float32), (0, Cout_p - Cout))
    scale = gamma_p * lax.rsqrt(var + eps)
    shift = beta_p - mean * scale

    # ---- fused scale/shift (+ ReLU) over lane-dense tiles -------------------------------
    M2 = N * Do
    r = 1
    for cand in (8, 4, 2):
        if M2 % cand == 0 and cand * Cout_p * L * 4 <= (4 << 20):
            r = cand
            break
    bn = pl.pallas_call(
        functools.partial(_bn_relu_kernel, use_relu=use_relu),
        grid=(M2 // r,),
        in_specs=[
            pl.BlockSpec((r, Cout_p, L), lambda i: (i, 0, 0)),
            pl.BlockSpec((Cout_p, 1), lambda i: (0, 0)),
            pl.BlockSpec((Cout_p, 1), lambda i: (0, 0)),
        ],
        out_specs=pl.BlockSpec((r, Cout_p, L), lambda i: (i, 0, 0)),
        out_shape=jax.ShapeDtypeStruct((M2, Cout_p, L), jnp.float32),
        compiler_params=pltpu.CompilerParams(
            dimension_semantics=("parallel",),
            vmem_limit_bytes=48 * 1024 * 1024),
    )(conv.reshape(M2, Cout_p, L), scale.reshape(Cout_p, 1), shift.reshape(Cout_p, 1))

    # strip channel / pitch padding, restore NCDHW (major-dim transpose only)
    out = bn.reshape(N, Do, Cout_p, Hp, Wp)[:, :, :Cout, :Ho, :Wo]
    return jnp.transpose(out, (0, 2, 1, 3, 4))


def _reference(x, weight, gamma, beta, *, stride, padding, output_padding,
               eps=1e-5, use_relu=True):
    """Pure-JAX reference (XLA conv) for correctness checking."""
    K = weight.shape[2]
    lo, hi = K - 1 - padding, K - 1 - padding + output_padding
    conv = lax.conv_general_dilated(
        x, jnp.flip(weight, axis=(2, 3, 4)),
        window_strides=(1, 1, 1),
        padding=[(lo, hi)] * 3,
        lhs_dilation=(stride,) * 3,
        dimension_numbers=('NCDHW', 'IODHW', 'NCDHW'))
    mean = jnp.mean(conv, axis=(0, 2, 3, 4), keepdims=True)
    var = jnp.mean(jnp.square(conv - mean), axis=(0, 2, 3, 4), keepdims=True)
    y = (conv - mean) / jnp.sqrt(var + eps)
    y = y * gamma.reshape(1, -1, 1, 1, 1) + beta.reshape(1, -1, 1, 1, 1)
    if use_relu:
        y = jnp.maximum(y, 0.0)
    return y


if __name__ == "__main__":
    # Small shapes consistent with GCNet's deconv blocks (upsample-by-2 usage).
    N, Cin, Cout = 2, 4, 8
    D = H = W = 4
    K, stride, padding, output_padding = 3, 2, 1, 1
    use_relu = True

    key = jax.random.PRNGKey(0)
    kx, kw = jax.random.split(key)
    x = jax.random.normal(kx, (N, Cin, D, H, W), dtype=jnp.float32)
    weight = 0.1 * jax.random.normal(kw, (Cin, Cout, K, K, K), dtype=jnp.float32)
    gamma = jnp.ones((Cout,), jnp.float32)    # BatchNorm3d default affine params
    beta = jnp.zeros((Cout,), jnp.float32)

    fwd = jax.jit(functools.partial(
        conv_transpose3d_bn, stride=stride, padding=padding,
        output_padding=output_padding, use_relu=use_relu))
    out = jax.block_until_ready(fwd(x, weight, gamma, beta))

    ref = _reference(x, weight, gamma, beta,
                     stride=stride, padding=padding,
                     output_padding=output_padding, use_relu=use_relu)
    assert out.shape == ref.shape == (N, Cout, 2 * D, 2 * H, 2 * W), out.shape
    assert jnp.allclose(out, ref, atol=1e-3, rtol=1e-3), \
        float(jnp.max(jnp.abs(out - ref)))

    print("KERNEL_OK")
</pallas_src>

<mosaic_0001>
module attributes {stable_mosaic.version = 11 : i64} {
  func.func @_convt_tap_kernel(%arg0: i32, %arg1: i32, %arg2: i32, %arg3: memref<1x1x8x100xf32, #tpu.memory_space<vmem>>, %arg4: memref<1x3x3x8x8xf32, #tpu.memory_space<vmem>>, %arg5: memref<1x100xf32, #tpu.memory_space<vmem>>, %arg6: memref<1x1x8x100xf32, #tpu.memory_space<vmem>>, %arg7: memref<1x1x8x2xf32, #tpu.memory_space<vmem>>) attributes {dimension_semantics = [#tpu.dimension_semantics<parallel>, #tpu.dimension_semantics<parallel>, #tpu.dimension_semantics<arbitrary>], iteration_bounds = array<i64: 2, 8, 3>, scalar_prefetch = 0 : i64, scratch_operands = 0 : i64, tpu.core_type = #tpu.core_type<tc>, window_params = [{transform_indices = @transform_0, window_bounds = array<i64: 1, 1, 8, 100>}, {transform_indices = @transform_1, window_bounds = array<i64: 1, 3, 3, 8, 8>}, {pipeline_mode = #tpu.pipeline_mode<synchronous>, transform_indices = @transform_2, window_bounds = array<i64: 1, 100>}, {transform_indices = @transform_3, window_bounds = array<i64: 1, 1, 8, 100>}, {transform_indices = @transform_4, window_bounds = array<i64: 1, 1, 8, 2>}]} {
    %c0_i32 = arith.constant 0 : i32
    %0 = arith.cmpi eq, %arg2, %c0_i32 : i32
    %1 = arith.extui %0 : i1 to i32
    %c0_i32_0 = arith.constant 0 : i32
    %2 = arith.cmpi ne, %1, %c0_i32_0 : i32
    scf.if %2 {
      %cst_65 = arith.constant 0.000000e+00 : f32
      %75 = vector.broadcast %cst_65 : f32 to vector<8x100xf32>
      %c0_66 = arith.constant 0 : index
      %c0_67 = arith.constant 0 : index
      %c0_68 = arith.constant 0 : index
      %c0_69 = arith.constant 0 : index
      %76 = vector.load %arg6[%c0_66, %c0_67, %c0_68, %c0_69] : memref<1x1x8x100xf32, #tpu.memory_space<vmem>>, vector<1x1x8x100xf32>
      %77 = vector.shape_cast %76 : vector<1x1x8x100xf32> to vector<8x100xf32>
      %78 = vector.shape_cast %75 : vector<8x100xf32> to vector<1x1x8x100xf32>
      tpu.vector_store %arg6[%c0_66, %c0_67, %c0_68, %c0_69], %78 {strides = array<i32>} : memref<1x1x8x100xf32, #tpu.memory_space<vmem>>, vector<1x1x8x100xf32>,
    } else {
    }
    %c0 = arith.constant 0 : index
    %c0_1 = arith.constant 0 : index
    %c0_2 = arith.constant 0 : index
    %c0_3 = arith.constant 0 : index
    %3 = vector.load %arg3[%c0, %c0_1, %c0_2, %c0_3] : memref<1x1x8x100xf32, #tpu.memory_space<vmem>>, vector<1x1x8x100xf32>
    %4 = vector.shape_cast %3 : vector<1x1x8x100xf32> to vector<8x100xf32>
    %cst = arith.constant 0.000000e+00 : f32
    %5 = vector.broadcast %cst : f32 to vector<8x100xf32>
    %c0_4 = arith.constant 0 : index
    %c0_5 = arith.constant 0 : index
    %c0_6 = arith.constant 0 : index
    %c0_7 = arith.constant 0 : index
    %c0_8 = arith.constant 0 : index
    %6 = vector.load %arg4[%c0_4, %c0_5, %c0_6, %c0_7, %c0_8] : memref<1x3x3x8x8xf32, #tpu.memory_space<vmem>>, vector<1x1x1x8x8xf32>
    %7 = vector.shape_cast %6 : vector<1x1x1x8x8xf32> to vector<8x8xf32>
    %cst_9 = arith.constant dense<0.000000e+00> : vector<8x100xf32>
    %8 = tpu.matmul %7, %4, %cst_9 {dimension_numbers = #tpu.dot_dimension_numbers<[1], [0], [0], [1], [0, 0, 1, 1], [], []>} : vector<8x8xf32>, vector<8x100xf32>, vector<8x100xf32> -> vector<8x100xf32>
    %9 = arith.addf %5, %8 : vector<8x100xf32>
    %c0_10 = arith.constant 0 : index
    %c0_11 = arith.constant 0 : index
    %c1 = arith.constant 1 : index
    %c0_12 = arith.constant 0 : index
    %c0_13 = arith.constant 0 : index
    %10 = vector.load %arg4[%c0_10, %c0_11, %c1, %c0_12, %c0_13] : memref<1x3x3x8x8xf32, #tpu.memory_space<vmem>>, vector<1x1x1x8x8xf32>
    %11 = vector.shape_cast %10 : vector<1x1x1x8x8xf32> to vector<8x8xf32>
    %cst_14 = arith.constant dense<0.000000e+00> : vector<8x100xf32>
    %12 = tpu.matmul %11, %4, %cst_14 {dimension_numbers = #tpu.dot_dimension_numbers<[1], [0], [0], [1], [0, 0, 1, 1], [], []>} : vector<8x8xf32>, vector<8x100xf32>, vector<8x100xf32> -> vector<8x100xf32>
    %13 = vector.extract_strided_slice %12 {offsets = [0, 1], sizes = [8, 99], strides = [1, 1]} : vector<8x100xf32> to vector<8x99xf32>
    %14 = vector.extract_strided_slice %12 {offsets = [0, 0], sizes = [8, 1], strides = [1, 1]} : vector<8x100xf32> to vector<8x1xf32>
    %15 = tpu.concatenate %13, %14 in 1 : vector<8x99xf32>, vector<8x1xf32> -> vector<8x100xf32>
    %16 = arith.addf %9, %15 : vector<8x100xf32>
    %c0_15 = arith.constant 0 : index
    %c0_16 = arith.constant 0 : index
    %c2 = arith.constant 2 : index
    %c0_17 = arith.constant 0 : index
    %c0_18 = arith.constant 0 : index
    %17 = vector.load %arg4[%c0_15, %c0_16, %c2, %c0_17, %c0_18] : memref<1x3x3x8x8xf32, #tpu.memory_space<vmem>>, vector<1x1x1x8x8xf32>
    %18 = vector.shape_cast %17 : vector<1x1x1x8x8xf32> to vector<8x8xf32>
    %cst_19 = arith.constant dense<0.000000e+00> : vector<8x100xf32>
    %19 = tpu.matmul %18, %4, %cst_19 {dimension_numbers = #tpu.dot_dimension_numbers<[1], [0], [0], [1], [0, 0, 1, 1], [], []>} : vector<8x8xf32>, vector<8x100xf32>, vector<8x100xf32> -> vector<8x100xf32>
    %20 = vector.extract_strided_slice %19 {offsets = [0, 2], sizes = [8, 98], strides = [1, 1]} : vector<8x100xf32> to vector<8x98xf32>
    %21 = vector.extract_strided_slice %19 {offsets = [0, 0], sizes = [8, 2], strides = [1, 1]} : vector<8x100xf32> to vector<8x2xf32>
    %22 = tpu.concatenate %20, %21 in 1 : vector<8x98xf32>, vector<8x2xf32> -> vector<8x100xf32>
    %23 = arith.addf %16, %22 : vector<8x100xf32>
    %c0_20 = arith.constant 0 : index
    %c1_21 = arith.constant 1 : index
    %c0_22 = arith.constant 0 : index
    %c0_23 = arith.constant 0 : index
    %c0_24 = arith.constant 0 : index
    %24 = vector.load %arg4[%c0_20, %c1_21, %c0_22, %c0_23, %c0_24] : memref<1x3x3x8x8xf32, #tpu.memory_space<vmem>>, vector<1x1x1x8x8xf32>
    %25 = vector.shape_cast %24 : vector<1x1x1x8x8xf32> to vector<8x8xf32>
    %cst_25 = arith.constant dense<0.000000e+00> : vector<8x100xf32>
    %26 = tpu.matmul %25, %4, %cst_25 {dimension_numbers = #tpu.dot_dimension_numbers<[1], [0], [0], [1], [0, 0, 1, 1], [], []>} : vector<8x8xf32>, vector<8x100xf32>, vector<8x100xf32> -> vector<8x100xf32>
    %27 = vector.extract_strided_slice %26 {offsets = [0, 10], sizes = [8, 90], strides = [1, 1]} : vector<8x100xf32> to vector<8x90xf32>
    %28 = vector.extract_strided_slice %26 {offsets = [0, 0], sizes = [8, 10], strides = [1, 1]} : vector<8x100xf32> to vector<8x10xf32>
    %29 = tpu.concatenate %27, %28 in 1 : vector<8x90xf32>, vector<8x10xf32> -> vector<8x100xf32>
    %30 = arith.addf %23, %29 : vector<8x100xf32>
    %c0_26 = arith.constant 0 : index
    %c1_27 = arith.constant 1 : index
    %c1_28 = arith.constant 1 : index
    %c0_29 = arith.constant 0 : index
    %c0_30 = arith.constant 0 : index
    %31 = vector.load %arg4[%c0_26, %c1_27, %c1_28, %c0_29, %c0_30] : memref<1x3x3x8x8xf32, #tpu.memory_space<vmem>>, vector<1x1x1x8x8xf32>
    %32 = vector.shape_cast %31 : vector<1x1x1x8x8xf32> to vector<8x8xf32>
    %cst_31 = arith.constant dense<0.000000e+00> : vector<8x100xf32>
    %33 = tpu.matmul %32, %4, %cst_31 {dimension_numbers = #tpu.dot_dimension_numbers<[1], [0], [0], [1], [0, 0, 1, 1], [], []>} : vector<8x8xf32>, vector<8x100xf32>, vector<8x100xf32> -> vector<8x100xf32>
    %34 = vector.extract_strided_slice %33 {offsets = [0, 11], sizes = [8, 89], strides = [1, 1]} : vector<8x100xf32> to vector<8x89xf32>
    %35 = vector.extract_strided_slice %33 {offsets = [0, 0], sizes = [8, 11], strides = [1, 1]} : vector<8x100xf32> to vector<8x11xf32>
    %36 = tpu.concatenate %34, %35 in 1 : vector<8x89xf32>, vector<8x11xf32> -> vector<8x100xf32>
    %37 = arith.addf %30, %36 : vector<8x100xf32>
    %c0_32 = arith.constant 0 : index
    %c1_33 = arith.constant 1 : index
    %c2_34 = arith.constant 2 : index
    %c0_35 = arith.constant 0 : index
    %c0_36 = arith.constant 0 : index
    %38 = vector.load %arg4[%c0_32, %c1_33, %c2_34, %c0_35, %c0_36] : memref<1x3x3x8x8xf32, #tpu.memory_space<vmem>>, vector<1x1x1x8x8xf32>
    %39 = vector.shape_cast %38 : vector<1x1x1x8x8xf32> to vector<8x8xf32>
    %cst_37 = arith.constant dense<0.000000e+00> : vector<8x100xf32>
    %40 = tpu.matmul %39, %4, %cst_37 {dimension_numbers = #tpu.dot_dimension_numbers<[1], [0], [0], [1], [0, 0, 1, 1], [], []>} : vector<8x8xf32>, vector<8x100xf32>, vector<8x100xf32> -> vector<8x100xf32>
    %41 = vector.extract_strided_slice %40 {offsets = [0, 12], sizes = [8, 88], strides = [1, 1]} : vector<8x100xf32> to vector<8x88xf32>
    %42 = vector.extract_strided_slice %40 {offsets = [0, 0], sizes = [8, 12], strides = [1, 1]} : vector<8x100xf32> to vector<8x12xf32>
    %43 = tpu.concatenate %41, %42 in 1 : vector<8x88xf32>, vector<8x12xf32> -> vector<8x100xf32>
    %44 = arith.addf %37, %43 : vector<8x100xf32>
    %c0_38 = arith.constant 0 : index
    %c2_39 = arith.constant 2 : index
    %c0_40 = arith.constant 0 : index
    %c0_41 = arith.constant 0 : index
    %c0_42 = arith.constant 0 : index
    %45 = vector.load %arg4[%c0_38, %c2_39, %c0_40, %c0_41, %c0_42] : memref<1x3x3x8x8xf32, #tpu.memory_space<vmem>>, vector<1x1x1x8x8xf32>
    %46 = vector.shape_cast %45 : vector<1x1x1x8x8xf32> to vector<8x8xf32>
    %cst_43 = arith.constant dense<0.000000e+00> : vector<8x100xf32>
    %47 = tpu.matmul %46, %4, %cst_43 {dimension_numbers = #tpu.dot_dimension_numbers<[1], [0], [0], [1], [0, 0, 1, 1], [], []>} : vector<8x8xf32>, vector<8x100xf32>, vector<8x100xf32> -> vector<8x100xf32>
    %48 = vector.extract_strided_slice %47 {offsets = [0, 20], sizes = [8, 80], strides = [1, 1]} : vector<8x100xf32> to vector<8x80xf32>
    %49 = vector.extract_strided_slice %47 {offsets = [0, 0], sizes = [8, 20], strides = [1, 1]} : vector<8x100xf32> to vector<8x20xf32>
    %50 = tpu.concatenate %48, %49 in 1 : vector<8x80xf32>, vector<8x20xf32> -> vector<8x100xf32>
    %51 = arith.addf %44, %50 : vector<8x100xf32>
    %c0_44 = arith.constant 0 : index
    %c2_45 = arith.constant 2 : index
    %c1_46 = arith.constant 1 : index
    %c0_47 = arith.constant 0 : index
    %c0_48 = arith.constant 0 : index
    %52 = vector.load %arg4[%c0_44, %c2_45, %c1_46, %c0_47, %c0_48] : memref<1x3x3x8x8xf32, #tpu.memory_space<vmem>>, vector<1x1x1x8x8xf32>
    %53 = vector.shape_cast %52 : vector<1x1x1x8x8xf32> to vector<8x8xf32>
    %cst_49 = arith.constant dense<0.000000e+00> : vector<8x100xf32>
    %54 = tpu.matmul %53, %4, %cst_49 {dimension_numbers = #tpu.dot_dimension_numbers<[1], [0], [0], [1], [0, 0, 1, 1], [], []>} : vector<8x8xf32>, vector<8x100xf32>, vector<8x100xf32> -> vector<8x100xf32>
    %55 = vector.extract_strided_slice %54 {offsets = [0, 21], sizes = [8, 79], strides = [1, 1]} : vector<8x100xf32> to vector<8x79xf32>
    %56 = vector.extract_strided_slice %54 {offsets = [0, 0], sizes = [8, 21], strides = [1, 1]} : vector<8x100xf32> to vector<8x21xf32>
    %57 = tpu.concatenate %55, %56 in 1 : vector<8x79xf32>, vector<8x21xf32> -> vector<8x100xf32>
    %58 = arith.addf %51, %57 : vector<8x100xf32>
    %c0_50 = arith.constant 0 : index
    %c2_51 = arith.constant 2 : index
    %c2_52 = arith.constant 2 : index
    %c0_53 = arith.constant 0 : index
    %c0_54 = arith.constant 0 : index
    %59 = vector.load %arg4[%c0_50, %c2_51, %c2_52, %c0_53, %c0_54] : memref<1x3x3x8x8xf32, #tpu.memory_space<vmem>>, vector<1x1x1x8x8xf32>
    %60 = vector.shape_cast %59 : vector<1x1x1x8x8xf32> to vector<8x8xf32>
    %cst_55 = arith.constant dense<0.000000e+00> : vector<8x100xf32>
    %61 = tpu.matmul %60, %4, %cst_55 {dimension_numbers = #tpu.dot_dimension_numbers<[1], [0], [0], [1], [0, 0, 1, 1], [], []>} : vector<8x8xf32>, vector<8x100xf32>, vector<8x100xf32> -> vector<8x100xf32>
    %62 = vector.extract_strided_slice %61 {offsets = [0, 22], sizes = [8, 78], strides = [1, 1]} : vector<8x100xf32> to vector<8x78xf32>
    %63 = vector.extract_strided_slice %61 {offsets = [0, 0], sizes = [8, 22], strides = [1, 1]} : vector<8x100xf32> to vector<8x22xf32>
    %64 = tpu.concatenate %62, %63 in 1 : vector<8x78xf32>, vector<8x22xf32> -> vector<8x100xf32>
    %65 = arith.addf %58, %64 : vector<8x100xf32>
    %c0_56 = arith.constant 0 : index
    %c0_57 = arith.constant 0 : index
    %c0_58 = arith.constant 0 : index
    %c0_59 = arith.constant 0 : index
    %66 = vector.load %arg6[%c0_56, %c0_57, %c0_58, %c0_59] : memref<1x1x8x100xf32, #tpu.memory_space<vmem>>, vector<1x1x8x100xf32>
    %67 = vector.shape_cast %66 : vector<1x1x8x100xf32> to vector<8x100xf32>
    %68 = arith.addf %67, %65 : vector<8x100xf32>
    %c0_60 = arith.constant 0 : index
    %c0_61 = arith.constant 0 : index
    %c0_62 = arith.constant 0 : index
    %c0_63 = arith.constant 0 : index
    %69 = vector.load %arg6[%c0_60, %c0_61, %c0_62, %c0_63] : memref<1x1x8x100xf32, #tpu.memory_space<vmem>>, vector<1x1x8x100xf32>
    %70 = vector.shape_cast %69 : vector<1x1x8x100xf32> to vector<8x100xf32>
    %71 = vector.shape_cast %68 : vector<8x100xf32> to vector<1x1x8x100xf32>
    tpu.vector_store %arg6[%c0_60, %c0_61, %c0_62, %c0_63], %71 {strides = array<i32>} : memref<1x1x8x100xf32, #tpu.memory_space<vmem>>, vector<1x1x8x100xf32>,
    %c2_i32 = arith.constant 2 : i32
    %72 = arith.cmpi eq, %arg2, %c2_i32 : i32
    %73 = arith.extui %72 : i1 to i32
    %c0_i32_64 = arith.constant 0 : i32
    %74 = arith.cmpi ne, %73, %c0_i32_64 : i32
    scf.if %74 {
      %c0_65 = arith.constant 0 : index
      %c0_66 = arith.constant 0 : index
      %c0_67 = arith.constant 0 : index
      %c0_68 = arith.constant 0 : index
      %75 = vector.load %arg6[%c0_65, %c0_66, %c0_67, %c0_68] : memref<1x1x8x100xf32, #tpu.memory_space<vmem>>, vector<1x1x8x100xf32>
      %76 = vector.shape_cast %75 : vector<1x1x8x100xf32> to vector<8x100xf32>
      %c0_69 = arith.constant 0 : index
      %c0_70 = arith.constant 0 : index
      %77 = vector.load %arg5[%c0_69, %c0_70] : memref<1x100xf32, #tpu.memory_space<vmem>>, vector<1x100xf32>
      %78 = vector.broadcast %77 : vector<1x100xf32> to vector<8x100xf32>
      %79 = arith.mulf %76, %78 : vector<8x100xf32>
      %cst_71 = arith.constant dense<0.000000e+00> : vector<8xf32>
      %80 = vector.multi_reduction <add>, %79, %cst_71 [1] : vector<8x100xf32> to vector<8xf32>
      %81 = vector.shape_cast %80 : vector<8xf32> to vector<8x1xf32>
      %82 = arith.mulf %79, %79 : vector<8x100xf32>
      %cst_72 = arith.constant dense<0.000000e+00> : vector<8xf32>
      %83 = vector.multi_reduction <add>, %82, %cst_72 [1] : vector<8x100xf32> to vector<8xf32>
      %84 = vector.shape_cast %83 : vector<8xf32> to vector<8x1xf32>
      %85 = tpu.concatenate %81, %84 in 1 : vector<8x1xf32>, vector<8x1xf32> -> vector<8x2xf32>
      %c0_73 = arith.constant 0 : index
      %c0_74 = arith.constant 0 : index
      %c0_75 = arith.constant 0 : index
      %c0_76 = arith.constant 0 : index
      %86 = vector.load %arg7[%c0_73, %c0_74, %c0_75, %c0_76] : memref<1x1x8x2xf32, #tpu.memory_space<vmem>>, vector<1x1x8x2xf32>
      %87 = vector.shape_cast %86 : vector<1x1x8x2xf32> to vector<8x2xf32>
      %88 = vector.shape_cast %85 : vector<8x2xf32> to vector<1x1x8x2xf32>
      tpu.vector_store %arg7[%c0_73, %c0_74, %c0_75, %c0_76], %88 {strides = array<i32>} : memref<1x1x8x2xf32, #tpu.memory_space<vmem>>, vector<1x1x8x2xf32>,
    } else {
    }
    return
  }
  func.func @transform_0(%arg0: i32, %arg1: i32, %arg2: i32) -> (i32, i32, i32, i32) {
    %0 = arith.addi %arg1, %arg2 : i32
    %c0_i32 = arith.constant 0 : i32
    %c0_i32_0 = arith.constant 0 : i32
    %c0_i32_1 = arith.constant 0 : i32
    return %arg0, %0, %c0_i32, %c0_i32_0 : i32, i32, i32, i32
  }
  func.func @transform_1(%arg0: i32, %arg1: i32, %arg2: i32) -> (i32, i32, i32, i32, i32) {
    %c0_i32 = arith.constant 0 : i32
    %c0_i32_0 = arith.constant 0 : i32
    %c0_i32_1 = arith.constant 0 : i32
    %c0_i32_2 = arith.constant 0 : i32
    %c0_i32_3 = arith.constant 0 : i32
    return %arg2, %c0_i32, %c0_i32_0, %c0_i32_1, %c0_i32_2 : i32, i32, i32, i32, i32
  }
  func.func @transform_2(%arg0: i32, %arg1: i32, %arg2: i32) -> (i32, i32) {
    %c0_i32 = arith.constant 0 : i32
    %c0_i32_0 = arith.constant 0 : i32
    %c0_i32_1 = arith.constant 0 : i32
    return %c0_i32, %c0_i32_0 : i32, i32
  }
  func.func @transform_3(%arg0: i32, %arg1: i32, %arg2: i32) -> (i32, i32, i32, i32) {
    %c0_i32 = arith.constant 0 : i32
    %c0_i32_0 = arith.constant 0 : i32
    %c0_i32_1 = arith.constant 0 : i32
    return %arg0, %arg1, %c0_i32, %c0_i32_0 : i32, i32, i32, i32
  }
  func.func @transform_4(%arg0: i32, %arg1: i32, %arg2: i32) -> (i32, i32, i32, i32) {
    %c0_i32 = arith.constant 0 : i32
    %c0_i32_0 = arith.constant 0 : i32
    %c0_i32_1 = arith.constant 0 : i32
    return %arg0, %arg1, %c0_i32, %c0_i32_0 : i32, i32, i32, i32
  }
}

module attributes {stable_mosaic.version = 11 : i64} {
  func.func @_bn_relu_kernel(%arg0: i32, %arg1: memref<8x8x100xf32, #tpu.memory_space<vmem>>, %arg2: memref<8x1xf32, #tpu.memory_space<vmem>>, %arg3: memref<8x1xf32, #tpu.memory_space<vmem>>, %arg4: memref<8x8x100xf32, #tpu.memory_space<vmem>>) attributes {dimension_semantics = [#tpu.dimension_semantics<parallel>], iteration_bounds = array<i64: 2>, scalar_prefetch = 0 : i64, scratch_operands = 0 : i64, tpu.core_type = #tpu.core_type<tc>, window_params = [{transform_indices = @transform_0, window_bounds = array<i64: 8, 8, 100>}, {pipeline_mode = #tpu.pipeline_mode<synchronous>, transform_indices = @transform_1, window_bounds = array<i64: 8, 1>}, {pipeline_mode = #tpu.pipeline_mode<synchronous>, transform_indices = @transform_2, window_bounds = array<i64: 8, 1>}, {transform_indices = @transform_3, window_bounds = array<i64: 8, 8, 100>}]} {
    %c0 = arith.constant 0 : index
    %c0_0 = arith.constant 0 : index
    %c0_1 = arith.constant 0 : index
    %0 = vector.load %arg1[%c0, %c0_0, %c0_1] : memref<8x8x100xf32, #tpu.memory_space<vmem>>, vector<8x8x100xf32>
    %c0_2 = arith.constant 0 : index
    %c0_3 = arith.constant 0 : index
    %1 = vector.load %arg2[%c0_2, %c0_3] : memref<8x1xf32, #tpu.memory_space<vmem>>, vector<8x1xf32>
    %2 = vector.shape_cast %1 : vector<8x1xf32> to vector<1x8x1xf32>
    %3 = vector.broadcast %2 : vector<1x8x1xf32> to vector<8x8x100xf32>
    %4 = arith.mulf %0, %3 : vector<8x8x100xf32>
    %c0_4 = arith.constant 0 : index
    %c0_5 = arith.constant 0 : index
    %5 = vector.load %arg3[%c0_4, %c0_5] : memref<8x1xf32, #tpu.memory_space<vmem>>, vector<8x1xf32>
    %6 = vector.shape_cast %5 : vector<8x1xf32> to vector<1x8x1xf32>
    %7 = vector.broadcast %6 : vector<1x8x1xf32> to vector<8x8x100xf32>
    %8 = arith.addf %4, %7 : vector<8x8x100xf32>
    %cst = arith.constant 0.000000e+00 : f32
    %9 = vector.broadcast %cst : f32 to vector<8x8x100xf32>
    %10 = arith.maximumf %8, %9 : vector<8x8x100xf32>
    %c0_6 = arith.constant 0 : index
    %c0_7 = arith.constant 0 : index
    %c0_8 = arith.constant 0 : index
    %11 = vector.load %arg4[%c0_6, %c0_7, %c0_8] : memref<8x8x100xf32, #tpu.memory_space<vmem>>, vector<8x8x100xf32>
    tpu.vector_store %arg4[%c0_6, %c0_7, %c0_8], %10 {strides = array<i32>} : memref<8x8x100xf32, #tpu.memory_space<vmem>>, vector<8x8x100xf32>,
    return
  }
  func.func @transform_0(%arg0: i32) -> (i32, i32, i32) {
    %c0_i32 = arith.constant 0 : i32
    %c0_i32_0 = arith.constant 0 : i32
    %c0_i32_1 = arith.constant 0 : i32
    return %arg0, %c0_i32, %c0_i32_0 : i32, i32, i32
  }
  func.func @transform_1(%arg0: i32) -> (i32, i32) {
    %c0_i32 = arith.constant 0 : i32
    %c0_i32_0 = arith.constant 0 : i32
    %c0_i32_1 = arith.constant 0 : i32
    return %c0_i32, %c0_i32_0 : i32, i32
  }
  func.func @transform_2(%arg0: i32) -> (i32, i32) {
    %c0_i32 = arith.constant 0 : i32
    %c0_i32_0 = arith.constant 0 : i32
    %c0_i32_1 = arith.constant 0 : i32
    return %c0_i32, %c0_i32_0 : i32, i32
  }
  func.func @transform_3(%arg0: i32) -> (i32, i32, i32) {
    %c0_i32 = arith.constant 0 : i32
    %c0_i32_0 = arith.constant 0 : i32
    %c0_i32_1 = arith.constant 0 : i32
    return %arg0, %c0_i32, %c0_i32_0 : i32, i32, i32
  }
}

</mosaic_0001>

<llo_original>
// kernel: conv_transpose3d_bn.3
$region0: #{conv_transpose3d_bn.3}
  #allocation0 [shape = 'u32[]', space=smem, size = 0x4, offset = 0x4, fixed_abs, tag = 'smem constant byte address 0x4 - core index']
  #allocation1 [shape = 'u32[72,128]{1,0:T(1,128)}', space=vmem, size = 0x9000, scoped, tag = 'internal scratch']
  %s0 = inlined_call_operand.vmem [shape: f32[16,8,100], index: 0, kind: input, shape index: {}]
  %s1 = inlined_call_operand.vmem [shape: f32[8,1], index: 1, kind: input, shape index: {}]
  %s2 = inlined_call_operand.vmem [shape: f32[8,1], index: 2, kind: input, shape index: {}]
  %s3 = inlined_call_operand.vmem [shape: f32[16,8,100], index: 3, kind: output, shape index: {}]
  %s4 = sld [smem:[#allocation0]]
  $region45: #{conv_transpose3d_bn.3} parent=0
    _
  %s6 = ssub.s32 1, %s4
  %s7 = scalar_select 0, %s6, %s4
  loop: start=0, step=1, limit=4
  $region2: #{conv_transpose3d_bn.3} parent=0 // loop_pre_header
    _
  $region3: #{conv_transpose3d_bn.3} parent=0 // loop_header
    %s9 = sphi 0, %s13
    %p10 = scmp.ge.s32.totalorder %s9, 4
    %s19 = sphi 0, %s21
    %s22 = sphi 0, %s19
    %s23 = sphi 0, %s22
    %s39 = sphi 0, %s23
    %s43 = sphi 0, %s43
    %s45 = sphi 0, %s43
    %s46 = sphi 0, %s45
    %s60 = sphi 0, %s46
    %s64 = sphi 0, %s64
    %s66 = sphi 0, %s64
    %s67 = sphi 0, %s66
    %s81 = sphi 0, %s67
    %s87 = sphi 0, %s89
    %s90 = sphi 0, %s87
    %s91 = sphi 0, %s90
    %s107 = sphi 0, %s91
  $region4: #{conv_transpose3d_bn.3} parent=0 // loop_header_branch
    %12 = sbr.rel (%p10) target = $region8
  $region5: #{conv_transpose3d_bn.3} parent=0 // loop_body
    %s14 = ssub.s32 %s9, 1
    %s15 = ssub.s32 %s9, 2
    %s16 = sadd.s32 %s9, 1
    %s17 = ssub.s32 %s9, %s16
    %p18 = scmp.eq.s32.totalorder %s17, 0
    %s20 = sadd.s32 %s19, 1
    %s21 = scalar_select %p18, %s19, %s20
    %p24 = pneg %p18
    %p25 = scmp.eq.s32.totalorder %s9, 1
    %p26 = por %p24, %p25
    %p27 = scmp.ne.s32.totalorder %s19, %s22
    %p28 = scmp.eq.s32.totalorder %s9, 0
    %p29 = por %p27, %p28
    %p30 = scmp.ne.s32.totalorder %s19, %s22
    %p31 = scmp.eq.s32.totalorder %s14, 1
    %p32 = por %p30, %p31
    %p33 = scmp.ne.s32.totalorder %s22, %s23
    %p34 = scmp.eq.s32.totalorder %s14, 0
    %p35 = por %p33, %p34
    %p36 = scmp.ne.s32.totalorder %s22, %s23
    %p37 = scmp.eq.s32.totalorder %s15, 1
    %p38 = por %p36, %p37
    %p40 = scmp.ne.s32.totalorder %s23, %s39
    %p41 = scmp.eq.s32.totalorder %s15, 0
    %p42 = por %p40, %p41
    %s44 = sadd.s32 %s43, 1
    %p47 = scmp.eq.s32.totalorder %s9, 1
    %p48 = scmp.ne.s32.totalorder %s43, %s45
    %p49 = scmp.eq.s32.totalorder %s9, 0
    %p50 = por %p48, %p49
    %p51 = scmp.ne.s32.totalorder %s43, %s45
    %p52 = scmp.eq.s32.totalorder %s14, 1
    %p53 = por %p51, %p52
    %p54 = scmp.ne.s32.totalorder %s45, %s46
    %p55 = scmp.eq.s32.totalorder %s14, 0
    %p56 = por %p54, %p55
    %p57 = scmp.ne.s32.totalorder %s45, %s46
    %p58 = scmp.eq.s32.totalorder %s15, 1
    %p59 = por %p57, %p58
    %p61 = scmp.ne.s32.totalorder %s46, %s60
    %p62 = scmp.eq.s32.totalorder %s15, 0
    %p63 = por %p61, %p62
    %s65 = sadd.s32 %s64, 1
    %p68 = scmp.eq.s32.totalorder %s9, 1
    %p69 = scmp.ne.s32.totalorder %s64, %s66
    %p70 = scmp.eq.s32.totalorder %s9, 0
    %p71 = por %p69, %p70
    %p72 = scmp.ne.s32.totalorder %s64, %s66
    %p73 = scmp.eq.s32.totalorder %s14, 1
    %p74 = por %p72, %p73
    %p75 = scmp.ne.s32.totalorder %s66, %s67
    %p76 = scmp.eq.s32.totalorder %s14, 0
    %p77 = por %p75, %p76
    %p78 = scmp.ne.s32.totalorder %s66, %s67
    %p79 = scmp.eq.s32.totalorder %s15, 1
    %p80 = por %p78, %p79
    %p82 = scmp.ne.s32.totalorder %s67, %s81
    %p83 = scmp.eq.s32.totalorder %s15, 0
    %p84 = por %p82, %p83
    %s85 = ssub.s32 %s9, %s16
    %p86 = scmp.eq.s32.totalorder %s85, 0
    %s88 = sadd.s32 %s87, 1
    %s89 = scalar_select %p86, %s87, %s88
    %p92 = pneg %p86
    %p93 = scmp.eq.s32.totalorder %s9, 1
    %p94 = por %p92, %p93
    %p95 = scmp.ne.s32.totalorder %s87, %s90
    %p96 = scmp.eq.s32.totalorder %s9, 0
    %p97 = por %p95, %p96
    %p98 = scmp.ne.s32.totalorder %s87, %s90
    %p99 = scmp.eq.s32.totalorder %s14, 1
    %p100 = por %p98, %p99
    %p101 = scmp.ne.s32.totalorder %s90, %s91
    %p102 = scmp.eq.s32.totalorder %s14, 0
    %p103 = por %p101, %p102
    %p104 = scmp.ne.s32.totalorder %s90, %s91
    %p105 = scmp.eq.s32.totalorder %s15, 1
    %p106 = por %p104, %p105
    %p108 = scmp.ne.s32.totalorder %s91, %s107
    %p109 = scmp.eq.s32.totalorder %s15, 0
    %p110 = por %p108, %p109
    %p111 = scmp.le.s32.totalorder 1, %s9
    %p112 = scmp.lt.s32.totalorder %s9, 3
    %p113 = pnand %p111, %p112
    %p114 = pneg %p113
    // Predicated region
    $region9: #{conv_transpose3d_bn.3} parent=5 // pred_check
      _
    $region10: #{conv_transpose3d_bn.3} parent=5 // pred_check_branch
      %116 = sbr.rel (%p113) target = $region12
    $region11: #{conv_transpose3d_bn.3} parent=5 // pred_region
      %s117 = ssub.s32 %s9, 1
      // Predicated region
      $region13: #{conv_transpose3d_bn.3} parent=11 // pred_check
        %p118 = pneg %p56
      $region14: #{conv_transpose3d_bn.3} parent=11 // pred_check_branch
        %120 = sbr.rel (%p118) target = $region16
      $region15: #{conv_transpose3d_bn.3} parent=11 // pred_region
        _
      $region16: #{conv_transpose3d_bn.3} parent=11 // pred_fallthru
        _
      // Predicated region
      $region17: #{conv_transpose3d_bn.3} parent=11 // pred_check
        %p121 = pneg %p77
      $region18: #{conv_transpose3d_bn.3} parent=11 // pred_check_branch
        %123 = sbr.rel (%p121) target = $region20
      $region19: #{conv_transpose3d_bn.3} parent=11 // pred_region
        _
      $region20: #{conv_transpose3d_bn.3} parent=11 // pred_fallthru
        _
    $region12: #{conv_transpose3d_bn.3} parent=5 // pred_fallthru
      _
    %p124 = scmp.lt.s32.totalorder %s9, 2
    // Predicated region
    $region21: #{conv_transpose3d_bn.3} parent=5 // pred_check
      %p125 = pneg %p124
    $region22: #{conv_transpose3d_bn.3} parent=5 // pred_check_branch
      %127 = sbr.rel (%p125) target = $region24
    $region23: #{conv_transpose3d_bn.3} parent=5 // pred_region
      // Predicated region
      $region25: #{conv_transpose3d_bn.3} parent=23 // pred_check
        %p128 = pneg %p29
      $region26: #{conv_transpose3d_bn.3} parent=23 // pred_check_branch
        %130 = sbr.rel (%p128) target = $region28
      $region27: #{conv_transpose3d_bn.3} parent=23 // pred_region
        %s131 = smul.u32 8, %s9
        %p132 = scmp.lt.s32.totalorder %s131, 15
        %s133 = scalar_select %p132, %s131, 15
        %s134 = smul.addr %s133, 8
        %s135 = scalar_lea.vmem %s0, %s134
        %s136 = smul.u32 8, %s9
      $region28: #{conv_transpose3d_bn.3} parent=23 // pred_fallthru
        _
    $region24: #{conv_transpose3d_bn.3} parent=5 // pred_fallthru
      _
    %p137 = scmp.le.s32.totalorder 1, %s9
    %p138 = scmp.lt.s32.totalorder %s9, 3
    %p139 = pnand %p137, %p138
    %p140 = pneg %p139
    // Predicated region
    $region29: #{conv_transpose3d_bn.3} parent=5 // pred_check
      _
    $region30: #{conv_transpose3d_bn.3} parent=5 // pred_check_branch
      %142 = sbr.rel (%p139) target = $region32
    $region31: #{conv_transpose3d_bn.3} parent=5 // pred_region
      %s143 = ssub.s32 %s9, 1
      %s144 = smul.u32 8, %s14
      %p145 = scmp.lt.s32.totalorder %s144, 15
      %s146 = scalar_select %p145, %s144, 15
      %s147 = smul.addr %s146, 8
      %s148 = scalar_lea.vmem %s0, %s147
      %p149 = pneg %p35
      %p150 = pneg %p32
      %p151 = pneg %p56
      %p152 = pneg %p53
      %p153 = pneg %p77
      %p154 = pneg %p74
      %p155 = pneg %p103
      %p156 = pneg %p100
      %s157 = smul.u32 8, %s14
      %p158 = scmp.lt.s32.totalorder %s157, 15
      %s159 = scalar_select %p158, %s157, 15
      %s160 = smul.addr %s159, 8
      %s161 = scalar_lea.vmem %s3, %s160
      %s162 = smul.u32 8, %s14
      %p163 = scmp.lt.s32.totalorder %s162, 15
      %s164 = scalar_select %p163, %s162, 15
      %s165 = smul.addr %s164, 8
      %s166 = scalar_lea.vmem %s0, %s165
      %s167 = smul.u32 8, %s14
      %s168 = smul.u32 8, %s14
      %p169 = scmp.lt.s32.totalorder %s168, 15
      %s170 = scalar_select %p169, %s168, 15
      %s171 = smul.addr %s170, 8
      %s172 = scalar_lea.vmem %s3, %s171
      %s173 = smul.u32 8, %s14
      %v174 = vld [vmem:[%s166] sm:$0xff]
      %v175 = vld [vmem:[%s166 + $0x8] sm:$0xff]
      %v176 = vld [vmem:[%s166 + $0x10] sm:$0xff]
      %v177 = vld [vmem:[%s166 + $0x18] sm:$0xff]
      %v178 = vld [vmem:[%s166 + $0x20] sm:$0xff]
      %v179 = vld [vmem:[%s166 + $0x28] sm:$0xff]
      %v180 = vld [vmem:[%s166 + $0x30] sm:$0xff]
      %v181 = vld [vmem:[%s166 + $0x38] sm:$0xff]
      %v182 = vld [vmem:[%s1] sm:$0xff]
      %184 = vset.pattern.permute.xlu0 0
      %185 = vperm.xlu0 %184, %v182
      %v186 = vpop.permute.xlu0 %185
      %v188 = vmul.f32 %v174, %v186
      %v189 = vmul.f32 %v175, %v186
      %v190 = vmul.f32 %v176, %v186
      %v191 = vmul.f32 %v177, %v186
      %v192 = vmul.f32 %v178, %v186
      %v193 = vmul.f32 %v179, %v186
      %v194 = vmul.f32 %v180, %v186
      %v195 = vmul.f32 %v181, %v186
      %v196 = vld [vmem:[%s2] sm:$0xff]
      %198 = vset.pattern.permute.xlu0 0
      %199 = vperm.xlu0 %198, %v196
      %v200 = vpop.permute.xlu0 %199
      %v202 = vadd.f32 %v188, %v200
      %v203 = vadd.f32 %v189, %v200
      %v204 = vadd.f32 %v190, %v200
      %v205 = vadd.f32 %v191, %v200
      %v206 = vadd.f32 %v192, %v200
      %v207 = vadd.f32 %v193, %v200
      %v208 = vadd.f32 %v194, %v200
      %v209 = vadd.f32 %v195, %v200
      %v210 = vmax.f32 %v202, 0.0
      %v211 = vmax.f32 %v203, 0.0
      %v212 = vmax.f32 %v204, 0.0
      %v213 = vmax.f32 %v205, 0.0
      %v214 = vmax.f32 %v206, 0.0
      %v215 = vmax.f32 %v207, 0.0
      %v216 = vmax.f32 %v208, 0.0
      %v217 = vmax.f32 %v209, 0.0
      %vm218 = vcmask 818176
      %219 = vst.msk [vmem:[%s172] sm:$0xff] %vm218, %v210
      %220 = vst.msk [vmem:[%s172 + $0x8] sm:$0xff] %vm218, %v211
      %221 = vst.msk [vmem:[%s172 + $0x10] sm:$0xff] %vm218, %v212
      %222 = vst.msk [vmem:[%s172 + $0x18] sm:$0xff] %vm218, %v213
      %223 = vst.msk [vmem:[%s172 + $0x20] sm:$0xff] %vm218, %v214
      %224 = vst.msk [vmem:[%s172 + $0x28] sm:$0xff] %vm218, %v215
      %225 = vst.msk [vmem:[%s172 + $0x30] sm:$0xff] %vm218, %v216
      %226 = vst.msk [vmem:[%s172 + $0x38] sm:$0xff] %vm218, %v217
      %s227 = smul.u32 8, %s14
      %p228 = scmp.lt.s32.totalorder %s227, 15
      %s229 = scalar_select %p228, %s227, 15
      %s230 = smul.addr %s229, 8
      %s231 = scalar_lea.vmem %s3, %s230
      // Predicated region
      $region33: #{conv_transpose3d_bn.3} parent=31 // pred_check
        %p232 = pneg %p100
      $region34: #{conv_transpose3d_bn.3} parent=31 // pred_check_branch
        %234 = sbr.rel (%p232) target = $region36
      $region35: #{conv_transpose3d_bn.3} parent=31 // pred_region
        %s235 = smul.u32 8, %s14
      $region36: #{conv_transpose3d_bn.3} parent=31 // pred_fallthru
        _
    $region32: #{conv_transpose3d_bn.3} parent=5 // pred_fallthru
      _
    %p236 = scmp.le.s32.totalorder 2, %s9
    // Predicated region
    $region37: #{conv_transpose3d_bn.3} parent=5 // pred_check
      %p237 = pneg %p236
    $region38: #{conv_transpose3d_bn.3} parent=5 // pred_check_branch
      %239 = sbr.rel (%p237) target = $region40
    $region39: #{conv_transpose3d_bn.3} parent=5 // pred_region
      %s240 = ssub.s32 %s9, 2
      // Predicated region
      $region41: #{conv_transpose3d_bn.3} parent=39 // pred_check
        %p241 = pneg %p106
      $region42: #{conv_transpose3d_bn.3} parent=39 // pred_check_branch
        %243 = sbr.rel (%p241) target = $region44
      $region43: #{conv_transpose3d_bn.3} parent=39 // pred_region
        %s244 = smul.u32 8, %s15
        %p245 = scmp.lt.s32.totalorder %s244, 15
        %s246 = scalar_select %p245, %s244, 15
        %s247 = smul.addr %s246, 8
        %s248 = scalar_lea.vmem %s3, %s247
      $region44: #{conv_transpose3d_bn.3} parent=39 // pred_fallthru
        _
    $region40: #{conv_transpose3d_bn.3} parent=5 // pred_fallthru
      _
  $region6: #{conv_transpose3d_bn.3} parent=0 // loop_footer
    %s13 = sadd.s32 1, %s9
  $region7: #{conv_transpose3d_bn.3} parent=0 // loop_footer_branch
    %8 = sbr.rel target = $region3
  $region8: #{conv_transpose3d_bn.3} parent=0 // loop_exit
    _

// kernel: conv_transpose3d_bn.2
$region0: #{conv_transpose3d_bn.2}
  #allocation0 [shape = 'u32[]', space=smem, size = 0x4, offset = 0x4, fixed_abs, tag = 'smem constant byte address 0x4 - core index']
  #allocation1 [shape = 'u32[72,128]{1,0:T(1,128)}', space=vmem, size = 0x9000, scoped, tag = 'internal scratch']
  %s0 = inlined_call_operand.vmem [shape: f32[2,10,8,100], index: 0, kind: input, shape index: {}]
  %s1 = inlined_call_operand.vmem [shape: f32[3,3,3,8,8], index: 1, kind: input, shape index: {}]
  %s2 = inlined_call_operand.vmem [shape: f32[1,100], index: 2, kind: input, shape index: {}]
  %s3 = inlined_call_operand.vmem [shape: f32[2,8,8,100], index: 3, kind: output, shape index: {0}]
  %s4 = inlined_call_operand.vmem [shape: f32[2,8,8,2], index: 4, kind: output, shape index: {1}]
  %5 = xla_tuple %s3, %s4
  %s6 = sld [smem:[#allocation0]]
  $region61: #{conv_transpose3d_bn.2} parent=0
    _
  %s8 = ssub.s32 1, %s6
  %s9 = scalar_select 0, %s8, %s6
  loop: start=0, step=1, limit=50
  $region2: #{conv_transpose3d_bn.2} parent=0 // loop_pre_header
    _
  $region3: #{conv_transpose3d_bn.2} parent=0 // loop_header
    %s11 = sphi 0, %s15
    %p12 = scmp.ge.s32.totalorder %s11, 50
    %s18 = sphi 0, %s37
    %s19 = sphi 0, %s33
    %s20 = sphi 0, %s29
    %s21 = sphi 0, %s18
    %s22 = sphi 0, %s19
    %s23 = sphi 0, %s20
    %s24 = sphi 0, %s21
    %s25 = sphi 0, %s22
    %s26 = sphi 0, %s23
    %s44 = sphi 0, %s46
    %s47 = sphi 0, %s44
    %s48 = sphi 0, %s47
    %s64 = sphi 0, %s48
    %s70 = sphi 0, %s72
    %s73 = sphi 0, %s70
    %s74 = sphi 0, %s73
    %s90 = sphi 0, %s74
    %s94 = sphi 0, %s94
    %s96 = sphi 0, %s94
    %s97 = sphi 0, %s96
    %s111 = sphi 0, %s97
    %s119 = sphi 0, %s121
    %s122 = sphi 0, %s119
    %s123 = sphi 0, %s122
    %s139 = sphi 0, %s123
    %s147 = sphi 0, %s149
    %s150 = sphi 0, %s147
    %s151 = sphi 0, %s150
    %s167 = sphi 0, %s151
  $region4: #{conv_transpose3d_bn.2} parent=0 // loop_header_branch
    %14 = sbr.rel (%p12) target = $region8
  $region5: #{conv_transpose3d_bn.2} parent=0 // loop_body
    %s16 = ssub.s32 %s11, 1
    %s17 = ssub.s32 %s11, 2
    %s27 = sadd.s32 1, %s20
    %p28 = scmp.ge.s32.totalorder %s27, 3
    %s29 = scalar_select %p28, 0, %s27
    %s30 = sadd.s32 1, %s19
    %s31 = scalar_select %p28, %s30, %s19
    %p32 = scmp.ge.s32.totalorder %s31, 8
    %s33 = scalar_select %p32, 0, %s31
    %s34 = sadd.s32 1, %s18
    %s35 = scalar_select %p32, %s34, %s18
    %p36 = scmp.ge.s32.totalorder %s35, 2
    %s37 = scalar_select %p36, 0, %s35
    %s38 = sadd.s32 %s19, %s20
    %s39 = sadd.s32 %s33, %s29
    %s40 = ssub.s32 %s18, %s37
    %s41 = ssub.s32 %s38, %s39
    %s42 = sor.u32 %s40, %s41
    %p43 = scmp.eq.s32.totalorder %s42, 0
    %s45 = sadd.s32 %s44, 1
    %s46 = scalar_select %p43, %s44, %s45
    %p49 = pneg %p43
    %p50 = scmp.eq.s32.totalorder %s11, 47
    %p51 = por %p49, %p50
    %p52 = scmp.ne.s32.totalorder %s44, %s47
    %p53 = scmp.eq.s32.totalorder %s11, 0
    %p54 = por %p52, %p53
    %p55 = scmp.ne.s32.totalorder %s44, %s47
    %p56 = scmp.eq.s32.totalorder %s16, 47
    %p57 = por %p55, %p56
    %p58 = scmp.ne.s32.totalorder %s47, %s48
    %p59 = scmp.eq.s32.totalorder %s16, 0
    %p60 = por %p58, %p59
    %p61 = scmp.ne.s32.totalorder %s47, %s48
    %p62 = scmp.eq.s32.totalorder %s17, 47
    %p63 = por %p61, %p62
    %p65 = scmp.ne.s32.totalorder %s48, %s64
    %p66 = scmp.eq.s32.totalorder %s17, 0
    %p67 = por %p65, %p66
    %s68 = ssub.s32 %s20, %s29
    %p69 = scmp.eq.s32.totalorder %s68, 0
    %s71 = sadd.s32 %s70, 1
    %s72 = scalar_select %p69, %s70, %s71
    %p75 = pneg %p69
    %p76 = scmp.eq.s32.totalorder %s11, 47
    %p77 = por %p75, %p76
    %p78 = scmp.ne.s32.totalorder %s70, %s73
    %p79 = scmp.eq.s32.totalorder %s11, 0
    %p80 = por %p78, %p79
    %p81 = scmp.ne.s32.totalorder %s70, %s73
    %p82 = scmp.eq.s32.totalorder %s16, 47
    %p83 = por %p81, %p82
    %p84 = scmp.ne.s32.totalorder %s73, %s74
    %p85 = scmp.eq.s32.totalorder %s16, 0
    %p86 = por %p84, %p85
    %p87 = scmp.ne.s32.totalorder %s73, %s74
    %p88 = scmp.eq.s32.totalorder %s17, 47
    %p89 = por %p87, %p88
    %p91 = scmp.ne.s32.totalorder %s74, %s90
    %p92 = scmp.eq.s32.totalorder %s17, 0
    %p93 = por %p91, %p92
    %s95 = sadd.s32 %s94, 1
    %p98 = scmp.eq.s32.totalorder %s11, 47
    %p99 = scmp.ne.s32.totalorder %s94, %s96
    %p100 = scmp.eq.s32.totalorder %s11, 0
    %p101 = por %p99, %p100
    %p102 = scmp.ne.s32.totalorder %s94, %s96
    %p103 = scmp.eq.s32.totalorder %s16, 47
    %p104 = por %p102, %p103
    %p105 = scmp.ne.s32.totalorder %s96, %s97
    %p106 = scmp.eq.s32.totalorder %s16, 0
    %p107 = por %p105, %p106
    %p108 = scmp.ne.s32.totalorder %s96, %s97
    %p109 = scmp.eq.s32.totalorder %s17, 47
    %p110 = por %p108, %p109
    %p112 = scmp.ne.s32.totalorder %s97, %s111
    %p113 = scmp.eq.s32.totalorder %s17, 0
    %p114 = por %p112, %p113
    %s115 = ssub.s32 %s18, %s37
    %s116 = ssub.s32 %s19, %s33
    %s117 = sor.u32 %s115, %s116
    %p118 = scmp.eq.s32.totalorder %s117, 0
    %s120 = sadd.s32 %s119, 1
    %s121 = scalar_select %p118, %s119, %s120
    %p124 = pneg %p118
    %p125 = scmp.eq.s32.totalorder %s11, 47
    %p126 = por %p124, %p125
    %p127 = scmp.ne.s32.totalorder %s119, %s122
    %p128 = scmp.eq.s32.totalorder %s11, 0
    %p129 = por %p127, %p128
    %p130 = scmp.ne.s32.totalorder %s119, %s122
    %p131 = scmp.eq.s32.totalorder %s16, 47
    %p132 = por %p130, %p131
    %p133 = scmp.ne.s32.totalorder %s122, %s123
    %p134 = scmp.eq.s32.totalorder %s16, 0
    %p135 = por %p133, %p134
    %p136 = scmp.ne.s32.totalorder %s122, %s123
    %p137 = scmp.eq.s32.totalorder %s17, 47
    %p138 = por %p136, %p137
    %p140 = scmp.ne.s32.totalorder %s123, %s139
    %p141 = scmp.eq.s32.totalorder %s17, 0
    %p142 = por %p140, %p141
    %s143 = ssub.s32 %s18, %s37
    %s144 = ssub.s32 %s19, %s33
    %s145 = sor.u32 %s143, %s144
    %p146 = scmp.eq.s32.totalorder %s145, 0
    %s148 = sadd.s32 %s147, 1
    %s149 = scalar_select %p146, %s147, %s148
    %p152 = pneg %p146
    %p153 = scmp.eq.s32.totalorder %s11, 47
    %p154 = por %p152, %p153
    %p155 = scmp.ne.s32.totalorder %s147, %s150
    %p156 = scmp.eq.s32.totalorder %s11, 0
    %p157 = por %p155, %p156
    %p158 = scmp.ne.s32.totalorder %s147, %s150
    %p159 = scmp.eq.s32.totalorder %s16, 47
    %p160 = por %p158, %p159
    %p161 = scmp.ne.s32.totalorder %s150, %s151
    %p162 = scmp.eq.s32.totalorder %s16, 0
    %p163 = por %p161, %p162
    %p164 = scmp.ne.s32.totalorder %s150, %s151
    %p165 = scmp.eq.s32.totalorder %s17, 47
    %p166 = por %p164, %p165
    %p168 = scmp.ne.s32.totalorder %s151, %s167
    %p169 = scmp.eq.s32.totalorder %s17, 0
    %p170 = por %p168, %p169
    %p171 = scmp.le.s32.totalorder 1, %s11
    %p172 = scmp.lt.s32.totalorder %s11, 49
    %p173 = pnand %p171, %p172
    %p174 = pneg %p173
    // Predicated region
    $region9: #{conv_transpose3d_bn.2} parent=5 // pred_check
      _
    $region10: #{conv_transpose3d_bn.2} parent=5 // pred_check_branch
      %176 = sbr.rel (%p173) target = $region12
    $region11: #{conv_transpose3d_bn.2} parent=5 // pred_region
      %s177 = ssub.s32 %s11, 1
      // Predicated region
      $region13: #{conv_transpose3d_bn.2} parent=11 // pred_check
        %p178 = pneg %p107
      $region14: #{conv_transpose3d_bn.2} parent=11 // pred_check_branch
        %180 = sbr.rel (%p178) target = $region16
      $region15: #{conv_transpose3d_bn.2} parent=11 // pred_region
        _
      $region16: #{conv_transpose3d_bn.2} parent=11 // pred_fallthru
        _
    $region12: #{conv_transpose3d_bn.2} parent=5 // pred_fallthru
      _
    %p181 = scmp.lt.s32.totalorder %s11, 48
    // Predicated region
    $region17: #{conv_transpose3d_bn.2} parent=5 // pred_check
      %p182 = pneg %p181
    $region18: #{conv_transpose3d_bn.2} parent=5 // pred_check_branch
      %184 = sbr.rel (%p182) target = $region20
    $region19: #{conv_transpose3d_bn.2} parent=5 // pred_region
      // Predicated region
      $region21: #{conv_transpose3d_bn.2} parent=19 // pred_check
        %p185 = pneg %p54
      $region22: #{conv_transpose3d_bn.2} parent=19 // pred_check_branch
        %187 = sbr.rel (%p185) target = $region24
      $region23: #{conv_transpose3d_bn.2} parent=19 // pred_region
        %s188 = sadd.s32 %s19, %s20
        %p189 = scmp.lt.s32.totalorder %s18, 1
        %s190 = scalar_select %p189, %s18, 1
        %p191 = scmp.lt.s32.totalorder %s188, 9
        %s192 = scalar_select %p191, %s188, 9
        %s193 = smul.addr %s190, 10
        %s194 = sadd.s32 %s192, %s193
        %s195 = smul.addr %s194, 8
        %s196 = scalar_lea.vmem %s0, %s195
        %s197 = sadd.s32 %s19, %s20
      $region24: #{conv_transpose3d_bn.2} parent=19 // pred_fallthru
        _
      // Predicated region
      $region25: #{conv_transpose3d_bn.2} parent=19 // pred_check
        %p198 = pneg %p80
      $region26: #{conv_transpose3d_bn.2} parent=19 // pred_check_branch
        %200 = sbr.rel (%p198) target = $region28
      $region27: #{conv_transpose3d_bn.2} parent=19 // pred_region
        %p201 = scmp.lt.s32.totalorder %s20, 2
        %s202 = scalar_select %p201, %s20, 2
        %s203 = smul.addr %s202, 9
        %s204 = smul.addr %s203, 8
        %s205 = scalar_lea.vmem %s1, %s204
      $region28: #{conv_transpose3d_bn.2} parent=19 // pred_fallthru
        _
    $region20: #{conv_transpose3d_bn.2} parent=5 // pred_fallthru
      _
    %p206 = scmp.le.s32.totalorder 1, %s11
    %p207 = scmp.lt.s32.totalorder %s11, 49
    %p208 = pnand %p206, %p207
    %p209 = pneg %p208
    // Predicated region
    $region29: #{conv_transpose3d_bn.2} parent=5 // pred_check
      _
    $region30: #{conv_transpose3d_bn.2} parent=5 // pred_check_branch
      %211 = sbr.rel (%p208) target = $region32
    $region31: #{conv_transpose3d_bn.2} parent=5 // pred_region
      %s212 = ssub.s32 %s11, 1
      %s213 = sadd.s32 %s22, %s23
      %p214 = scmp.lt.s32.totalorder %s21, 1
      %s215 = scalar_select %p214, %s21, 1
      %p216 = scmp.lt.s32.totalorder %s213, 9
      %s217 = scalar_select %p216, %s213, 9
      %s218 = smul.addr %s215, 10
      %s219 = sadd.s32 %s217, %s218
      %s220 = smul.addr %s219, 8
      %s221 = scalar_lea.vmem %s0, %s220
      %p222 = pneg %p60
      %p223 = pneg %p57
      %p224 = scmp.lt.s32.totalorder %s23, 2
      %s225 = scalar_select %p224, %s23, 2
      %s226 = smul.addr %s225, 9
      %s227 = smul.addr %s226, 8
      %s228 = scalar_lea.vmem %s1, %s227
      %p229 = pneg %p86
      %p230 = pneg %p83
      %p231 = pneg %p107
      %p232 = pneg %p104
      %p233 = pneg %p135
      %p234 = pneg %p132
      %p235 = scmp.lt.s32.totalorder %s21, 1
      %s236 = scalar_select %p235, %s21, 1
      %p237 = scmp.lt.s32.totalorder %s22, 7
      %s238 = scalar_select %p237, %s22, 7
      %s239 = smul.addr %s236, 8
      %s240 = sadd.s32 %s238, %s239
      %s241 = smul.addr %s240, 8
      %s242 = scalar_lea.vmem %s3, %s241
      %p243 = pneg %p163
      %p244 = pneg %p160
      %p245 = scmp.lt.s32.totalorder %s21, 1
      %s246 = scalar_select %p245, %s21, 1
      %p247 = scmp.lt.s32.totalorder %s22, 7
      %s248 = scalar_select %p247, %s22, 7
      %s249 = smul.addr %s246, 8
      %s250 = sadd.s32 %s248, %s249
      %s251 = smul.addr %s250, 8
      %s252 = scalar_lea.vmem %s4, %s251
      %s253 = sadd.s32 %s22, %s23
      %p254 = scmp.lt.s32.totalorder %s21, 1
      %s255 = scalar_select %p254, %s21, 1
      %p256 = scmp.lt.s32.totalorder %s253, 9
      %s257 = scalar_select %p256, %s253, 9
      %s258 = smul.addr %s255, 10
      %s259 = sadd.s32 %s257, %s258
      %s260 = smul.addr %s259, 8
      %s261 = scalar_lea.vmem %s0, %s260
      %s262 = sadd.s32 %s22, %s23
      %p263 = scmp.lt.s32.totalorder %s23, 2
      %s264 = scalar_select %p263, %s23, 2
      %s265 = smul.addr %s264, 9
      %s266 = smul.addr %s265, 8
      %s267 = scalar_lea.vmem %s1, %s266
      %p268 = scmp.lt.s32.totalorder %s21, 1
      %s269 = scalar_select %p268, %s21, 1
      %p270 = scmp.lt.s32.totalorder %s22, 7
      %s271 = scalar_select %p270, %s22, 7
      %s272 = smul.addr %s269, 8
      %s273 = sadd.s32 %s271, %s272
      %s274 = smul.addr %s273, 8
      %s275 = scalar_lea.vmem %s3, %s274
      %p276 = scmp.lt.s32.totalorder %s21, 1
      %s277 = scalar_select %p276, %s21, 1
      %p278 = scmp.lt.s32.totalorder %s22, 7
      %s279 = scalar_select %p278, %s22, 7
      %s280 = smul.addr %s277, 8
      %s281 = sadd.s32 %s279, %s280
      %s282 = smul.addr %s281, 8
      %s283 = scalar_lea.vmem %s4, %s282
      %p284 = scmp.eq.s32.totalorder %s23, 0
      // Predicated region
      $region33: #{conv_transpose3d_bn.2} parent=31 // pred_check
        %p285 = pneg %p284
      $region34: #{conv_transpose3d_bn.2} parent=31 // pred_check_branch
        %287 = sbr.rel (%p285) target = $region36
      $region35: #{conv_transpose3d_bn.2} parent=31 // pred_region
        %vm288 = vcmask 818176
        %289 = vst.msk [vmem:[%s275] sm:$0xff] %vm288, 0.0
      $region36: #{conv_transpose3d_bn.2} parent=31 // pred_fallthru
        _
      %v290 = vld [vmem:[%s261] sm:$0xff]
      %v291 = vld [vmem:[%s267] sm:$0xff]
      %s292 = scalar_lea.vmem %s267, 8
      %v293 = vld [vmem:[%s292] sm:$0xff]
      %vm294 = vcmask 64512
      %v296 = vsel %vm294, %v293, 0
      %298 = vmatpush.msra.mxu0 0.0
      %299 = vmatpush.msra.mxu0 0.0
      %300 = vmatpush.msra.mxu0 0.0
      %301 = vmatpush.msra.mxu0 0.0
      %302 = vmatpush.msra.mxu0 0.0
      %303 = vmatpush.msra.mxu0 0.0
      %304 = vmatpush.msra.mxu0 0.0
      %305 = vmatpush.msra.mxu0 0.0
      %306 = vmatpush.msra.mxu0 0.0
      %307 = vmatpush.msra.mxu0 0.0
      %308 = vmatpush.msra.mxu0 0.0
      %309 = vmatpush.msra.mxu0 0.0
      %310 = vmatpush.msra.mxu0 0.0
      %311 = vmatpush.msra.mxu0 0.0
      %312 = vmatpush.msra.mxu0 0.0
      %313 = vmatpush.msra.mxu0 %v290
      %314 = vmatmul.f32.gmra.mxu0 %v296
      %v315 = vpop.f32.mrf.mxu0
      %v316 = vadd.f32 0.0, %v315
      %317 = vdwg.mxu0
      %319 = vrot.lane.b32.xlu0 %v316, 127
      %v320 = vpop.permute.xlu0 %319
      %322 = vrot.lane.b32.xlu0 %v316, 99
      %v323 = vpop.permute.xlu0 %322
      %vm325 = vcmask 809984
      %v326 = vsel %vm325, %v320, %v323
      %v328 = vsel %vm294, %v291, 0
      %330 = vmatpush.msra.mxu0 0.0
      %331 = vmatpush.msra.mxu0 0.0
      %332 = vmatpush.msra.mxu0 0.0
      %333 = vmatpush.msra.mxu0 0.0
      %334 = vmatpush.msra.mxu0 0.0
      %335 = vmatpush.msra.mxu0 0.0
      %336 = vmatpush.msra.mxu0 0.0
      %337 = vmatpush.msra.mxu0 0.0
      %338 = vmatpush.msra.mxu0 0.0
      %339 = vmatpush.msra.mxu0 0.0
      %340 = vmatpush.msra.mxu0 0.0
      %341 = vmatpush.msra.mxu0 0.0
      %342 = vmatpush.msra.mxu0 0.0
      %343 = vmatpush.msra.mxu0 0.0
      %344 = vmatpush.msra.mxu0 0.0
      %345 = vmatpush.msra.mxu0 %v290
      %346 = vmatmul.f32.gmra.mxu0 %v328
      %v347 = vpop.f32.mrf.mxu0
      %v348 = vadd.f32 %v326, %v347
      %349 = vdwg.mxu0
      %s350 = scalar_lea.vmem %s267, 16
      %v351 = vld [vmem:[%s350] sm:$0xff]
      %v353 = vsel %vm294, %v351, 0
      %355 = vmatpush.msra.mxu0 0.0
      %356 = vmatpush.msra.mxu0 0.0
      %357 = vmatpush.msra.mxu0 0.0
      %358 = vmatpush.msra.mxu0 0.0
      %359 = vmatpush.msra.mxu0 0.0
      %360 = vmatpush.msra.mxu0 0.0
      %361 = vmatpush.msra.mxu0 0.0
      %362 = vmatpush.msra.mxu0 0.0
      %363 = vmatpush.msra.mxu0 0.0
      %364 = vmatpush.msra.mxu0 0.0
      %365 = vmatpush.msra.mxu0 0.0
      %366 = vmatpush.msra.mxu0 0.0
      %367 = vmatpush.msra.mxu0 0.0
      %368 = vmatpush.msra.mxu0 0.0
      %369 = vmatpush.msra.mxu0 0.0
      %370 = vmatpush.msra.mxu0 %v290
      %371 = vmatmul.f32.gmra.mxu0 %v353
      %v372 = vpop.f32.mrf.mxu0
      %v373 = vadd.f32 0.0, %v372
      %374 = vdwg.mxu0
      %376 = vrot.lane.b32.xlu0 %v373, 126
      %v377 = vpop.permute.xlu0 %376
      %379 = vrot.lane.b32.xlu0 %v373, 98
      %v380 = vpop.permute.xlu0 %379
      %vm382 = vcmask 801792
      %v383 = vsel %vm382, %v377, %v380
      %v384 = vadd.f32 %v348, %v383
      %s385 = scalar_lea.vmem %s267, 24
      %v386 = vld [vmem:[%s385] sm:$0xff]
      %v388 = vsel %vm294, %v386, 0
      %390 = vmatpush.msra.mxu0 0.0
      %391 = vmatpush.msra.mxu0 0.0
      %392 = vmatpush.msra.mxu0 0.0
      %393 = vmatpush.msra.mxu0 0.0
      %394 = vmatpush.msra.mxu0 0.0
      %395 = vmatpush.msra.mxu0 0.0
      %396 = vmatpush.msra.mxu0 0.0
      %397 = vmatpush.msra.mxu0 0.0
      %398 = vmatpush.msra.mxu0 0.0
      %399 = vmatpush.msra.mxu0 0.0
      %400 = vmatpush.msra.mxu0 0.0
      %401 = vmatpush.msra.mxu0 0.0
      %402 = vmatpush.msra.mxu0 0.0
      %403 = vmatpush.msra.mxu0 0.0
      %404 = vmatpush.msra.mxu0 0.0
      %405 = vmatpush.msra.mxu0 %v290
      %406 = vmatmul.f32.gmra.mxu0 %v388
      %v407 = vpop.f32.mrf.mxu0
      %v408 = vadd.f32 0.0, %v407
      %409 = vdwg.mxu0
      %411 = vrot.lane.b32.xlu0 %v408, 118
      %v412 = vpop.permute.xlu0 %411
      %414 = vrot.lane.b32.xlu0 %v408, 90
      %v415 = vpop.permute.xlu0 %414
      %vm417 = vcmask 736256
      %v418 = vsel %vm417, %v412, %v415
      %v419 = vadd.f32 %v384, %v418
      %s420 = scalar_lea.vmem %s267, 32
      %v421 = vld [vmem:[%s420] sm:$0xff]
      %v423 = vsel %vm294, %v421, 0
      %425 = vmatpush.msra.mxu0 0.0
      %426 = vmatpush.msra.mxu0 0.0
      %427 = vmatpush.msra.mxu0 0.0
      %428 = vmatpush.msra.mxu0 0.0
      %429 = vmatpush.msra.mxu0 0.0
      %430 = vmatpush.msra.mxu0 0.0
      %431 = vmatpush.msra.mxu0 0.0
      %432 = vmatpush.msra.mxu0 0.0
      %433 = vmatpush.msra.mxu0 0.0
      %434 = vmatpush.msra.mxu0 0.0
      %435 = vmatpush.msra.mxu0 0.0
      %436 = vmatpush.msra.mxu0 0.0
      %437 = vmatpush.msra.mxu0 0.0
      %438 = vmatpush.msra.mxu0 0.0
      %439 = vmatpush.msra.mxu0 0.0
      %440 = vmatpush.msra.mxu0 %v290
      %441 = vmatmul.f32.gmra.mxu0 %v423
      %v442 = vpop.f32.mrf.mxu0
      %v443 = vadd.f32 0.0, %v442
      %444 = vdwg.mxu0
      %446 = vrot.lane.b32.xlu0 %v443, 117
      %v447 = vpop.permute.xlu0 %446
      %449 = vrot.lane.b32.xlu0 %v443, 89
      %v450 = vpop.permute.xlu0 %449
      %vm452 = vcmask 728064
      %v453 = vsel %vm452, %v447, %v450
      %v454 = vadd.f32 %v419, %v453
      %s455 = scalar_lea.vmem %s267, 40
      %v456 = vld [vmem:[%s455] sm:$0xff]
      %v458 = vsel %vm294, %v456, 0
      %460 = vmatpush.msra.mxu0 0.0
      %461 = vmatpush.msra.mxu0 0.0
      %462 = vmatpush.msra.mxu0 0.0
      %463 = vmatpush.msra.mxu0 0.0
      %464 = vmatpush.msra.mxu0 0.0
      %465 = vmatpush.msra.mxu0 0.0
      %466 = vmatpush.msra.mxu0 0.0
      %467 = vmatpush.msra.mxu0 0.0
      %468 = vmatpush.msra.mxu0 0.0
      %469 = vmatpush.msra.mxu0 0.0
      %470 = vmatpush.msra.mxu0 0.0
      %471 = vmatpush.msra.mxu0 0.0
      %472 = vmatpush.msra.mxu0 0.0
      %473 = vmatpush.msra.mxu0 0.0
      %474 = vmatpush.msra.mxu0 0.0
      %475 = vmatpush.msra.mxu0 %v290
      %476 = vmatmul.f32.gmra.mxu0 %v458
      %v477 = vpop.f32.mrf.mxu0
      %v478 = vadd.f32 0.0, %v477
      %479 = vdwg.mxu0
      %481 = vrot.lane.b32.xlu0 %v478, 116
      %v482 = vpop.permute.xlu0 %481
      %484 = vrot.lane.b32.xlu0 %v478, 88
      %v485 = vpop.permute.xlu0 %484
      %vm487 = vcmask 719872
      %v488 = vsel %vm487, %v482, %v485
      %v489 = vadd.f32 %v454, %v488
      %s490 = scalar_lea.vmem %s267, 48
      %v491 = vld [vmem:[%s490] sm:$0xff]
      %v493 = vsel %vm294, %v491, 0
      %495 = vmatpush.msra.mxu0 0.0
      %496 = vmatpush.msra.mxu0 0.0
      %497 = vmatpush.msra.mxu0 0.0
      %498 = vmatpush.msra.mxu0 0.0
      %499 = vmatpush.msra.mxu0 0.0
      %500 = vmatpush.msra.mxu0 0.0
      %501 = vmatpush.msra.mxu0 0.0
      %502 = vmatpush.msra.mxu0 0.0
      %503 = vmatpush.msra.mxu0 0.0
      %504 = vmatpush.msra.mxu0 0.0
      %505 = vmatpush.msra.mxu0 0.0
      %506 = vmatpush.msra.mxu0 0.0
      %507 = vmatpush.msra.mxu0 0.0
      %508 = vmatpush.msra.mxu0 0.0
      %509 = vmatpush.msra.mxu0 0.0
      %510 = vmatpush.msra.mxu0 %v290
      %511 = vmatmul.f32.gmra.mxu0 %v493
      %v512 = vpop.f32.mrf.mxu0
      %v513 = vadd.f32 0.0, %v512
      %514 = vdwg.mxu0
      %516 = vrot.lane.b32.xlu0 %v513, 108
      %v517 = vpop.permute.xlu0 %516
      %519 = vrot.lane.b32.xlu0 %v513, 80
      %v520 = vpop.permute.xlu0 %519
      %vm522 = vcmask 654336
      %v523 = vsel %vm522, %v517, %v520
      %v524 = vadd.f32 %v489, %v523
      %s525 = scalar_lea.vmem %s267, 56
      %v526 = vld [vmem:[%s525] sm:$0xff]
      %v528 = vsel %vm294, %v526, 0
      %530 = vmatpush.msra.mxu0 0.0
      %531 = vmatpush.msra.mxu0 0.0
      %532 = vmatpush.msra.mxu0 0.0
      %533 = vmatpush.msra.mxu0 0.0
      %534 = vmatpush.msra.mxu0 0.0
      %535 = vmatpush.msra.mxu0 0.0
      %536 = vmatpush.msra.mxu0 0.0
      %537 = vmatpush.msra.mxu0 0.0
      %538 = vmatpush.msra.mxu0 0.0
      %539 = vmatpush.msra.mxu0 0.0
      %540 = vmatpush.msra.mxu0 0.0
      %541 = vmatpush.msra.mxu0 0.0
      %542 = vmatpush.msra.mxu0 0.0
      %543 = vmatpush.msra.mxu0 0.0
      %544 = vmatpush.msra.mxu0 0.0
      %545 = vmatpush.msra.mxu0 %v290
      %546 = vmatmul.f32.gmra.mxu0 %v528
      %v547 = vpop.f32.mrf.mxu0
      %v548 = vadd.f32 0.0, %v547
      %549 = vdwg.mxu0
      %551 = vrot.lane.b32.xlu0 %v548, 107
      %v552 = vpop.permute.xlu0 %551
      %554 = vrot.lane.b32.xlu0 %v548, 79
      %v555 = vpop.permute.xlu0 %554
      %vm557 = vcmask 646144
      %v558 = vsel %vm557, %v552, %v555
      %v559 = vadd.f32 %v524, %v558
      %s560 = scalar_lea.vmem %s267, 64
      %v561 = vld [vmem:[%s560] sm:$0xff]
      %v563 = vsel %vm294, %v561, 0
      %565 = vmatpush.msra.mxu0 0.0
      %566 = vmatpush.msra.mxu0 0.0
      %567 = vmatpush.msra.mxu0 0.0
      %568 = vmatpush.msra.mxu0 0.0
      %569 = vmatpush.msra.mxu0 0.0
      %570 = vmatpush.msra.mxu0 0.0
      %571 = vmatpush.msra.mxu0 0.0
      %572 = vmatpush.msra.mxu0 0.0
      %573 = vmatpush.msra.mxu0 0.0
      %574 = vmatpush.msra.mxu0 0.0
      %575 = vmatpush.msra.mxu0 0.0
      %576 = vmatpush.msra.mxu0 0.0
      %577 = vmatpush.msra.mxu0 0.0
      %578 = vmatpush.msra.mxu0 0.0
      %579 = vmatpush.msra.mxu0 0.0
      %580 = vmatpush.msra.mxu0 %v290
      %581 = vmatmul.f32.gmra.mxu0 %v563
      %v582 = vpop.f32.mrf.mxu0
      %v583 = vadd.f32 0.0, %v582
      %584 = vdwg.mxu0
      %586 = vrot.lane.b32.xlu0 %v583, 106
      %v587 = vpop.permute.xlu0 %586
      %589 = vrot.lane.b32.xlu0 %v583, 78
      %v590 = vpop.permute.xlu0 %589
      %vm592 = vcmask 637952
      %v593 = vsel %vm592, %v587, %v590
      %v594 = vadd.f32 %v559, %v593
      %v595 = vld [vmem:[%s275] sm:$0xff]
      %v596 = vadd.f32 %v595, %v594
      %vm597 = vcmask 818176
      %598 = vst.msk [vmem:[%s275] sm:$0xff] %vm597, %v596
      %p599 = scmp.eq.s32.totalorder %s23, 2
      // Predicated region
      $region37: #{conv_transpose3d_bn.2} parent=31 // pred_check
        %p600 = pneg %p599
      $region38: #{conv_transpose3d_bn.2} parent=31 // pred_check_branch
        %602 = sbr.rel (%p600) target = $region40
      $region39: #{conv_transpose3d_bn.2} parent=31 // pred_region
        %v603 = vld [vmem:[%s275] sm:$0xff]
        %v604 = vld [vmem:[%s2] sm:$0x1]
        %v606 = vperm.slane %v604, 0
        %v608 = vmul.f32 %v603, %v606
        %v609 = vsel %vm597, %v608, 0.0
        %610 = vadd.xlane.f32.xlu0 %v609
        %v611 = vpop.xlane.xlu0 %610
        %v612 = vmul.f32 %v608, %v608
        %v613 = vsel %vm597, %v612, 0.0
        %614 = vadd.xlane.f32.xlu0 %v613
        %v615 = vpop.xlane.xlu0 %614
        %vm616 = vcmask 7168
        %v617 = vsel %vm616, %v611, %v615
        %vm618 = vcmask 15360
        %619 = vst.msk [vmem:[%s283] sm:$0xff] %vm618, %v617
      $region40: #{conv_transpose3d_bn.2} parent=31 // pred_fallthru
        _
      %p620 = scmp.lt.s32.totalorder %s21, 1
      %s621 = scalar_select %p620, %s21, 1
      %p622 = scmp.lt.s32.totalorder %s22, 7
      %s623 = scalar_select %p622, %s22, 7
      %s624 = smul.addr %s621, 8
      %s625 = sadd.s32 %s623, %s624
      %s626 = smul.addr %s625, 8
      %s627 = scalar_lea.vmem %s3, %s626
      %p628 = scmp.lt.s32.totalorder %s21, 1
      %s629 = scalar_select %p628, %s21, 1
      %p630 = scmp.lt.s32.totalorder %s22, 7
      %s631 = scalar_select %p630, %s22, 7
      %s632 = smul.addr %s629, 8
      %s633 = sadd.s32 %s631, %s632
      %s634 = smul.addr %s633, 8
      %s635 = scalar_lea.vmem %s4, %s634
      // Predicated region
      $region41: #{conv_transpose3d_bn.2} parent=31 // pred_check
        %p636 = pneg %p132
      $region42: #{conv_transpose3d_bn.2} parent=31 // pred_check_branch
        %638 = sbr.rel (%p636) target = $region44
      $region43: #{conv_transpose3d_bn.2} parent=31 // pred_region
        _
      $region44: #{conv_transpose3d_bn.2} parent=31 // pred_fallthru
        _
      // Predicated region
      $region45: #{conv_transpose3d_bn.2} parent=31 // pred_check
        %p639 = pneg %p160
      $region46: #{conv_transpose3d_bn.2} parent=31 // pred_check_branch
        %641 = sbr.rel (%p639) target = $region48
      $region47: #{conv_transpose3d_bn.2} parent=31 // pred_region
        _
      $region48: #{conv_transpose3d_bn.2} parent=31 // pred_fallthru
        _
    $region32: #{conv_transpose3d_bn.2} parent=5 // pred_fallthru
      _
    %p642 = scmp.le.s32.totalorder 2, %s11
    // Predicated region
    $region49: #{conv_transpose3d_bn.2} parent=5 // pred_check
      %p643 = pneg %p642
    $region50: #{conv_transpose3d_bn.2} parent=5 // pred_check_branch
      %645 = sbr.rel (%p643) target = $region52
    $region51: #{conv_transpose3d_bn.2} parent=5 // pred_region
      %s646 = ssub.s32 %s11, 2
      // Predicated region
      $region53: #{conv_transpose3d_bn.2} parent=51 // pred_check
        %p647 = pneg %p138
      $region54: #{conv_transpose3d_bn.2} parent=51 // pred_check_branch
        %649 = sbr.rel (%p647) target = $region56
      $region55: #{conv_transpose3d_bn.2} parent=51 // pred_region
        %p650 = scmp.lt.s32.totalorder %s24, 1
        %s651 = scalar_select %p650, %s24, 1
        %p652 = scmp.lt.s32.totalorder %s25, 7
        %s653 = scalar_select %p652, %s25, 7
        %s654 = smul.addr %s651, 8
        %s655 = sadd.s32 %s653, %s654
        %s656 = smul.addr %s655, 8
        %s657 = scalar_lea.vmem %s3, %s656
      $region56: #{conv_transpose3d_bn.2} parent=51 // pred_fallthru
        _
      // Predicated region
      $region57: #{conv_transpose3d_bn.2} parent=51 // pred_check
        %p658 = pneg %p166
      $region58: #{conv_transpose3d_bn.2} parent=51 // pred_check_branch
        %660 = sbr.rel (%p658) target = $region60
      $region59: #{conv_transpose3d_bn.2} parent=51 // pred_region
        %p661 = scmp.lt.s32.totalorder %s24, 1
        %s662 = scalar_select %p661, %s24, 1
        %p663 = scmp.lt.s32.totalorder %s25, 7
        %s664 = scalar_select %p663, %s25, 7
        %s665 = smul.addr %s662, 8
        %s666 = sadd.s32 %s664, %s665
        %s667 = smul.addr %s666, 8
        %s668 = scalar_lea.vmem %s4, %s667
      $region60: #{conv_transpose3d_bn.2} parent=51 // pred_fallthru
        _
    $region52: #{conv_transpose3d_bn.2} parent=5 // pred_fallthru
      _
  $region6: #{conv_transpose3d_bn.2} parent=0 // loop_footer
    %s15 = sadd.s32 1, %s11
  $region7: #{conv_transpose3d_bn.2} parent=0 // loop_footer_branch
    %10 = sbr.rel target = $region3
  $region8: #{conv_transpose3d_bn.2} parent=0 // loop_exit
    _

</llo_original>
